<compile_context>
chip_gen: v7x
topology: tpu7x:2x2x1
jax: 0.10.0
libtpu: 0.0.40
codegen_flags: <defaults>
</compile_context>

<pallas_src>
import functools

import jax
import jax.numpy as jnp
from jax.experimental import pallas as pl
from jax.experimental.pallas import tpu as pltpu

LANES = 128


def _bce_blur_kernel(pred_ref, true_ref, out_ref, *,
                     inv_alpha: float, n_valid: int, tile_rows: int,
                     tiles_per_split: int, num_full_tiles: int):
    s = pl.program_id(0)                 # parallel split (both TCs on v7x)
    k = pl.program_id(1)                 # sequential tiles within the split
    t = s * tiles_per_split + k          # unclamped global tile index

    x = pred_ref[...].astype(jnp.float32)
    y = true_ref[...].astype(jnp.float32)

    # Shared exp(-|x|) feeds both the stable BCE term and the sigmoid.
    e = jnp.exp(-jnp.abs(x))
    # Numerically stable BCE-with-logits, reduction='none':
    #   loss = max(x, 0) - x*y + log1p(exp(-|x|))
    bce = jnp.maximum(x, 0.0) - x * y + jnp.log1p(e)

    # sigmoid(x) = 1/(1+e) for x >= 0, and e/(1+e) = 1 - 1/(1+e) for x < 0.
    r = pl.reciprocal(1.0 + e, approx=False)
    p = jnp.where(x >= 0.0, r, 1.0 - r)

    dx = p - y
    alpha_factor = 1.0 - jnp.exp((dx - 1.0) * inv_alpha)   # multiply, no divide
    loss = bce * alpha_factor

    def _partial(vals):
        # (tile_rows, 128) -> (8, 128): regroups whole (8, 128) native tiles,
        # so it lowers to plain vreg adds on the VPU (no XLU scalar reduce).
        return vals.reshape(tile_rows // 8, 8, LANES).sum(axis=0)

    # Zero the resident accumulator block at the start of each split.
    @pl.when(k == 0)
    def _init():
        out_ref[0] = jnp.zeros((8, LANES), dtype=jnp.float32)

    # Steady state: tile fully inside the valid region, no mask needed.
    @pl.when(t < num_full_tiles)
    def _body():
        out_ref[0] += _partial(loss)

    # Tail / overshoot tiles: mask out everything past n_valid.  This covers
    # both the ragged last data tile (partial boundary DMA) and any fully
    # out-of-range tile of a ragged split whose input DMA index was clamped —
    # the select discards any garbage (incl. NaN/Inf) before accumulation.
    @pl.when(t >= num_full_tiles)
    def _tail():
        row_ids = jax.lax.broadcasted_iota(jnp.int32, loss.shape, 0) + t * tile_rows
        col_ids = jax.lax.broadcasted_iota(jnp.int32, loss.shape, 1)
        flat_idx = row_ids * LANES + col_ids
        out_ref[0] += _partial(jnp.where(flat_idx < n_valid, loss, 0.0))


def bce_blur_with_logits_loss(pred: jax.Array, true: jax.Array,
                              alpha: float = 0.05,
                              tile_rows: int = 2048) -> jax.Array:
    assert pred.shape == true.shape
    n = pred.size

    # Native sublane packing: f32 -> 8 rows, bf16 -> 16, int8/fp8 -> 32.
    def _pack(d):
        return max(1, 4 // jnp.dtype(d).itemsize)
    row_mult = 8 * max(_pack(pred.dtype), _pack(true.dtype))

    pred_f = pred.reshape(-1)
    true_f = true.reshape(-1)

    # Common case: n already a multiple of the native tile -> reshape is free
    # (no HBM copy).  Otherwise fall back to a real pad; the padded elements
    # land in the masked tail tile so their value is irrelevant.
    blk_min = row_mult * LANES
    n_slab = pl.cdiv(n, blk_min) * blk_min
    if n_slab != n:
        pred_f = jnp.pad(pred_f, (0, n_slab - n))
        true_f = jnp.pad(true_f, (0, n_slab - n))
    rows = n_slab // LANES
    pred2d = pred_f.reshape(rows, LANES)
    true2d = true_f.reshape(rows, LANES)

    # Tile sizing: clamp to the data, keep a multiple of the dtype's sublane
    # pack.  (bf16 callers may pass a larger tile_rows to keep DMA bytes/step
    # constant; default keeps the f32 intermediates' VMEM footprint safe on
    # every chip generation, incl. v7x's 64 MiB / 32 MiB-scoped VMEM.)
    tr = (max(row_mult, min(int(tile_rows), rows)) // row_mult) * row_mult
    # Prefer >= 2 tiles so the parallel axis can span both v7x TensorCores
    # instead of producing a 1-step grid for mid-size inputs.
    if pl.cdiv(rows, tr) < 2 and rows >= 2 * row_mult:
        tr = max(row_mult, ((rows // 2) // row_mult) * row_mult)
    num_tiles = pl.cdiv(rows, tr)

    n_splits = 2 if num_tiles >= 2 else 1
    tiles_per_split = pl.cdiv(num_tiles, n_splits)

    tile_elems = tr * LANES
    num_full_tiles = n // tile_elems   # tiles needing no validity mask

    def in_index_map(s, k):
        t = s * tiles_per_split + k
        # Clamp so overshoot tiles of a ragged split issue an in-range
        # (duplicated) DMA; their contribution is masked to zero in-kernel.
        return (jnp.minimum(t, num_tiles - 1), 0)

    # NOTE: alpha / n / tile sizes are static -> distinct input sizes trigger
    # a recompile (fine for fixed-shape training loops).
    kernel = functools.partial(
        _bce_blur_kernel,
        inv_alpha=float(1.0 / (float(alpha) + 1e-4)),
        n_valid=int(n),
        tile_rows=int(tr),
        tiles_per_split=int(tiles_per_split),
        num_full_tiles=int(num_full_tiles),
    )

    partials = pl.pallas_call(
        kernel,
        out_shape=jax.ShapeDtypeStruct((n_splits, 8, LANES), jnp.float32),
        grid_spec=pltpu.PrefetchScalarGridSpec(
            num_scalar_prefetch=0,
            grid=(n_splits, tiles_per_split),
            in_specs=[
                pl.BlockSpec((tr, LANES), in_index_map),
                pl.BlockSpec((tr, LANES), in_index_map),
            ],
            out_specs=pl.BlockSpec((1, 8, LANES), lambda s, k: (s, 0, 0)),
        ),
        compiler_params=pltpu.CompilerParams(
            dimension_semantics=("parallel", "arbitrary")),
    )(pred2d, true2d)

    # Tiny final reduction over n_splits * 1024 partials.
    return jnp.sum(partials) / jnp.float32(n)


def _reference(pred, true, alpha=0.05):
    # Pure-JAX reference of the PyTorch forward.
    x = pred.astype(jnp.float32)
    y = true.astype(jnp.float32)
    loss = jnp.maximum(x, 0.0) - x * y + jnp.log1p(jnp.exp(-jnp.abs(x)))
    p = jax.nn.sigmoid(x)
    dx = p - y
    loss = loss * (1.0 - jnp.exp((dx - 1.0) / (alpha + 1e-4)))
    return jnp.mean(loss)


if __name__ == "__main__":
    key = jax.random.PRNGKey(0)
    k1, k2 = jax.random.split(key)

    # Small NCHW-shaped logits/targets, consistent with a detection head.
    pred = jax.random.normal(k1, (2, 4, 16, 16), dtype=jnp.float32)
    true = (jax.random.uniform(k2, (2, 4, 16, 16)) > 0.5).astype(jnp.float32)

    out = bce_blur_with_logits_loss(pred, true, alpha=0.05)
    out = jax.block_until_ready(out)

    ref = _reference(pred, true, alpha=0.05)
    assert jnp.allclose(out, ref, rtol=1e-5, atol=1e-6), (out, ref)

    print("KERNEL_OK")
</pallas_src>

<mosaic_0001>
module attributes {stable_mosaic.version = 11 : i64} {
  func.func @_bce_blur_kernel(%arg0: i32, %arg1: i32, %arg2: memref<8x128xf32, #tpu.memory_space<vmem>>, %arg3: memref<8x128xf32, #tpu.memory_space<vmem>>, %arg4: memref<1x8x128xf32, #tpu.memory_space<vmem>>) attributes {dimension_semantics = [#tpu.dimension_semantics<parallel>, #tpu.dimension_semantics<arbitrary>], iteration_bounds = array<i64: 2, 1>, scalar_prefetch = 0 : i64, scratch_operands = 0 : i64, tpu.core_type = #tpu.core_type<tc>, window_params = [{transform_indices = @transform_0, window_bounds = array<i64: 8, 128>}, {transform_indices = @transform_1, window_bounds = array<i64: 8, 128>}, {transform_indices = @transform_2, window_bounds = array<i64: 1, 8, 128>}]} {
    %c1_i32 = arith.constant 1 : i32
    %0 = arith.muli %arg0, %c1_i32 : i32
    %1 = arith.addi %0, %arg1 : i32
    %c0 = arith.constant 0 : index
    %c0_0 = arith.constant 0 : index
    %2 = vector.load %arg2[%c0, %c0_0] : memref<8x128xf32, #tpu.memory_space<vmem>>, vector<8x128xf32>
    %c0_1 = arith.constant 0 : index
    %c0_2 = arith.constant 0 : index
    %3 = vector.load %arg3[%c0_1, %c0_2] : memref<8x128xf32, #tpu.memory_space<vmem>>, vector<8x128xf32>
    %4 = math.absf %2 : vector<8x128xf32>
    %cst = arith.constant 0.000000e+00 : f32
    %5 = vector.broadcast %cst : f32 to vector<8x128xf32>
    %6 = arith.subf %5, %4 : vector<8x128xf32>
    %7 = math.exp %6 : vector<8x128xf32>
    %cst_3 = arith.constant 0.000000e+00 : f32
    %8 = vector.broadcast %cst_3 : f32 to vector<8x128xf32>
    %9 = arith.maximumf %2, %8 : vector<8x128xf32>
    %10 = arith.mulf %2, %3 : vector<8x128xf32>
    %11 = arith.subf %9, %10 : vector<8x128xf32>
    %12 = math.log1p %7 : vector<8x128xf32>
    %13 = arith.addf %11, %12 : vector<8x128xf32>
    %cst_4 = arith.constant 1.000000e+00 : f32
    %14 = vector.broadcast %cst_4 : f32 to vector<8x128xf32>
    %15 = arith.addf %14, %7 : vector<8x128xf32>
    %16 = tpu.reciprocal %15 : vector<8x128xf32> -> vector<8x128xf32>
    %cst_5 = arith.constant 0.000000e+00 : f32
    %17 = vector.broadcast %cst_5 : f32 to vector<8x128xf32>
    %18 = arith.cmpf oge, %2, %17 : vector<8x128xf32>
    %cst_6 = arith.constant 1.000000e+00 : f32
    %19 = vector.broadcast %cst_6 : f32 to vector<8x128xf32>
    %20 = arith.subf %19, %16 : vector<8x128xf32>
    %21 = arith.select %18, %16, %20 : vector<8x128xi1>, vector<8x128xf32>
    %22 = arith.subf %21, %3 : vector<8x128xf32>
    %cst_7 = arith.constant 1.000000e+00 : f32
    %23 = vector.broadcast %cst_7 : f32 to vector<8x128xf32>
    %24 = arith.subf %22, %23 : vector<8x128xf32>
    %cst_8 = arith.constant 19.9600792 : f32
    %25 = vector.broadcast %cst_8 : f32 to vector<8x128xf32>
    %26 = arith.mulf %24, %25 : vector<8x128xf32>
    %27 = math.exp %26 : vector<8x128xf32>
    %cst_9 = arith.constant 1.000000e+00 : f32
    %28 = vector.broadcast %cst_9 : f32 to vector<8x128xf32>
    %29 = arith.subf %28, %27 : vector<8x128xf32>
    %30 = arith.mulf %13, %29 : vector<8x128xf32>
    %c0_i32 = arith.constant 0 : i32
    %31 = arith.cmpi eq, %arg1, %c0_i32 : i32
    %32 = arith.extui %31 : i1 to i32
    %c0_i32_10 = arith.constant 0 : i32
    %33 = arith.cmpi ne, %32, %c0_i32_10 : i32
    scf.if %33 {
      %cst_14 = arith.constant 0.000000e+00 : f32
      %40 = vector.broadcast %cst_14 : f32 to vector<8x128xf32>
      %c0_15 = arith.constant 0 : index
      %c0_16 = arith.constant 0 : index
      %c0_17 = arith.constant 0 : index
      %41 = vector.load %arg4[%c0_15, %c0_16, %c0_17] : memref<1x8x128xf32, #tpu.memory_space<vmem>>, vector<1x8x128xf32>
      %42 = vector.shape_cast %41 : vector<1x8x128xf32> to vector<8x128xf32>
      %43 = vector.shape_cast %40 : vector<8x128xf32> to vector<1x8x128xf32>
      tpu.vector_store %arg4[%c0_15, %c0_16, %c0_17], %43 {strides = array<i32>} : memref<1x8x128xf32, #tpu.memory_space<vmem>>, vector<1x8x128xf32>,
    } else {
    }
    %c2_i32 = arith.constant 2 : i32
    %34 = arith.cmpi slt, %1, %c2_i32 : i32
    %35 = arith.extui %34 : i1 to i32
    %c0_i32_11 = arith.constant 0 : i32
    %36 = arith.cmpi ne, %35, %c0_i32_11 : i32
    scf.if %36 {
      %c0_14 = arith.constant 0 : index
      %c0_15 = arith.constant 0 : index
      %c0_16 = arith.constant 0 : index
      %40 = vector.load %arg4[%c0_14, %c0_15, %c0_16] : memref<1x8x128xf32, #tpu.memory_space<vmem>>, vector<1x8x128xf32>
      %41 = vector.shape_cast %40 : vector<1x8x128xf32> to vector<8x128xf32>
      %42 = vector.shape_cast %30 : vector<8x128xf32> to vector<1x8x128xf32>
      %cst_17 = arith.constant dense<0.000000e+00> : vector<8x128xf32>
      %43 = vector.multi_reduction <add>, %42, %cst_17 [0] : vector<1x8x128xf32> to vector<8x128xf32>
      %44 = arith.addf %41, %43 : vector<8x128xf32>
      %c0_18 = arith.constant 0 : index
      %c0_19 = arith.constant 0 : index
      %c0_20 = arith.constant 0 : index
      %45 = vector.load %arg4[%c0_18, %c0_19, %c0_20] : memref<1x8x128xf32, #tpu.memory_space<vmem>>, vector<1x8x128xf32>
      %46 = vector.shape_cast %45 : vector<1x8x128xf32> to vector<8x128xf32>
      %47 = vector.shape_cast %44 : vector<8x128xf32> to vector<1x8x128xf32>
      tpu.vector_store %arg4[%c0_18, %c0_19, %c0_20], %47 {strides = array<i32>} : memref<1x8x128xf32, #tpu.memory_space<vmem>>, vector<1x8x128xf32>,
    } else {
    }
    %c2_i32_12 = arith.constant 2 : i32
    %37 = arith.cmpi sge, %1, %c2_i32_12 : i32
    %38 = arith.extui %37 : i1 to i32
    %c0_i32_13 = arith.constant 0 : i32
    %39 = arith.cmpi ne, %38, %c0_i32_13 : i32
    scf.if %39 {
      %40 = tpu.iota {dimensions = array<i32: 0>} : vector<8x128xi32>
      %c8_i32 = arith.constant 8 : i32
      %41 = arith.muli %1, %c8_i32 : i32
      %42 = vector.broadcast %41 : i32 to vector<8x128xi32>
      %43 = arith.addi %40, %42 : vector<8x128xi32>
      %44 = tpu.iota {dimensions = array<i32: 1>} : vector<8x128xi32>
      %c128_i32 = arith.constant 128 : i32
      %45 = vector.broadcast %c128_i32 : i32 to vector<8x128xi32>
      %46 = arith.muli %43, %45 : vector<8x128xi32>
      %47 = arith.addi %46, %44 : vector<8x128xi32>
      %c0_14 = arith.constant 0 : index
      %c0_15 = arith.constant 0 : index
      %c0_16 = arith.constant 0 : index
      %48 = vector.load %arg4[%c0_14, %c0_15, %c0_16] : memref<1x8x128xf32, #tpu.memory_space<vmem>>, vector<1x8x128xf32>
      %49 = vector.shape_cast %48 : vector<1x8x128xf32> to vector<8x128xf32>
      %c2048_i32 = arith.constant 2048 : i32
      %50 = vector.broadcast %c2048_i32 : i32 to vector<8x128xi32>
      %51 = arith.cmpi slt, %47, %50 : vector<8x128xi32>
      %cst_17 = arith.constant 0.000000e+00 : f32
      %52 = vector.broadcast %cst_17 : f32 to vector<8x128xf32>
      %53 = arith.select %51, %30, %52 : vector<8x128xi1>, vector<8x128xf32>
      %54 = vector.shape_cast %53 : vector<8x128xf32> to vector<1x8x128xf32>
      %cst_18 = arith.constant dense<0.000000e+00> : vector<8x128xf32>
      %55 = vector.multi_reduction <add>, %54, %cst_18 [0] : vector<1x8x128xf32> to vector<8x128xf32>
      %56 = arith.addf %49, %55 : vector<8x128xf32>
      %c0_19 = arith.constant 0 : index
      %c0_20 = arith.constant 0 : index
      %c0_21 = arith.constant 0 : index
      %57 = vector.load %arg4[%c0_19, %c0_20, %c0_21] : memref<1x8x128xf32, #tpu.memory_space<vmem>>, vector<1x8x128xf32>
      %58 = vector.shape_cast %57 : vector<1x8x128xf32> to vector<8x128xf32>
      %59 = vector.shape_cast %56 : vector<8x128xf32> to vector<1x8x128xf32>
      tpu.vector_store %arg4[%c0_19, %c0_20, %c0_21], %59 {strides = array<i32>} : memref<1x8x128xf32, #tpu.memory_space<vmem>>, vector<1x8x128xf32>,
    } else {
    }
    return
  }
  func.func @transform_0(%arg0: i32, %arg1: i32) -> (i32, i32) {
    %c1_i32 = arith.constant 1 : i32
    %0 = arith.muli %arg0, %c1_i32 : i32
    %1 = arith.addi %0, %arg1 : i32
    %c1_i32_0 = arith.constant 1 : i32
    %2 = arith.minsi %1, %c1_i32_0 : i32
    %c0_i32 = arith.constant 0 : i32
    %c0_i32_1 = arith.constant 0 : i32
    return %2, %c0_i32 : i32, i32
  }
  func.func @transform_1(%arg0: i32, %arg1: i32) -> (i32, i32) {
    %c1_i32 = arith.constant 1 : i32
    %0 = arith.muli %arg0, %c1_i32 : i32
    %1 = arith.addi %0, %arg1 : i32
    %c1_i32_0 = arith.constant 1 : i32
    %2 = arith.minsi %1, %c1_i32_0 : i32
    %c0_i32 = arith.constant 0 : i32
    %c0_i32_1 = arith.constant 0 : i32
    return %2, %c0_i32 : i32, i32
  }
  func.func @transform_2(%arg0: i32, %arg1: i32) -> (i32, i32, i32) {
    %c0_i32 = arith.constant 0 : i32
    %c0_i32_0 = arith.constant 0 : i32
    %c0_i32_1 = arith.constant 0 : i32
    return %arg0, %c0_i32, %c0_i32_0 : i32, i32, i32
  }
}

</mosaic_0001>

<llo_original>
// kernel: tpu_custom_call.1
$region0: #{tpu_custom_call.1}
  #allocation0 [shape = 'u32[]', space=smem, size = 0x4, offset = 0x4, fixed_abs, tag = 'smem constant byte address 0x4 - core index']
  #allocation1 [shape = 'u32[144,128]{1,0:T(1,128)}', space=vmem, size = 0x12000, scoped, tag = 'internal scratch']
  %s0 = inlined_call_operand.hbm [shape: f32[16,128], index: 0, kind: input, shape index: {}]
  %s1 = inlined_call_operand.hbm [shape: f32[16,128], index: 1, kind: input, shape index: {}]
  %s2 = inlined_call_operand.hbm [shape: f32[2,8,128], index: 2, kind: output, shape index: {}]
  %s3 = sld [smem:[#allocation0]]
  $region61: #{tpu_custom_call.1} parent=0
    _
  %s5 = ssub.s32 1, %s3
  %s6 = scalar_select 0, %s5, %s3
  $region1: #{tpu_custom_call.1} parent=0
    #allocation2 [shape = 'u8[8192]{0}', space=vmem, size = 0x2000, scoped, tag = 'input window, operand 0']
    #allocation3 [shape = 's32[2]{0}', space=sflag, size = 0x8, scoped, tag = 'scoped memory for tpu_custom_call.1']
    #allocation4 [shape = 's32[2]{0}', space=sflag, size = 0x8, scoped, tag = 'scoped memory for tpu_custom_call.1']
    #allocation5 [shape = 'u8[8192]{0}', space=vmem, size = 0x2000, scoped, tag = 'input window, operand 1']
    #allocation6 [shape = 's32[2]{0}', space=sflag, size = 0x8, scoped, tag = 'scoped memory for tpu_custom_call.1']
    #allocation7 [shape = 'u8[8192]{0}', space=vmem, size = 0x2000, scoped, tag = 'output window, operand 0']
    %7 = vsyncpa [#allocation3], 0
    %s8 = scalar_lea.sflag [#allocation3], 1
    %9 = vsyncpa %s8, 0
    %10 = vsyncpa [#allocation6], 0
    %s11 = scalar_lea.sflag [#allocation6], 1
    %12 = vsyncpa %s11, 0
    %13 = vsyncpa [#allocation4], 0
    %s14 = scalar_lea.sflag [#allocation4], 1
    %15 = vsyncpa %s14, 0
    loop: start=0, step=1, limit=4
    $region2: #{tpu_custom_call.1} parent=1 // loop_pre_header
      _
    $region3: #{tpu_custom_call.1} parent=1 // loop_header
      %s17 = sphi 0, %s21
      %p18 = scmp.ge.s32.totalorder %s17, 4
      %s24 = sphi 0, %s36
      %s25 = sphi 0, %s32
      %s26 = sphi 0, %s24
      %s27 = sphi 0, %s25
      %s28 = sphi 0, %s26
      %s29 = sphi 0, %s27
      %s45 = sphi 0, %s47
      %s48 = sphi 0, %s45
      %s49 = sphi 0, %s48
      %s65 = sphi 0, %s49
      %s77 = sphi 0, %s79
      %s80 = sphi 0, %s77
      %s81 = sphi 0, %s80
      %s97 = sphi 0, %s81
      %s103 = sphi 0, %s105
      %s106 = sphi 0, %s103
      %s107 = sphi 0, %s106
      %s123 = sphi 0, %s107
    $region4: #{tpu_custom_call.1} parent=1 // loop_header_branch
      %20 = sbr.rel (%p18) target = $region8
    $region5: #{tpu_custom_call.1} parent=1 // loop_body
      %s22 = ssub.s32 %s17, 1
      %s23 = ssub.s32 %s17, 2
      %s30 = sadd.s32 1, %s25
      %p31 = scmp.ge.s32.totalorder %s30, 1
      %s32 = scalar_select %p31, 0, %s30
      %s33 = sadd.s32 1, %s24
      %s34 = scalar_select %p31, %s33, %s24
      %p35 = scmp.ge.s32.totalorder %s34, 2
      %s36 = scalar_select %p35, 0, %s34
      %s37 = sadd.s32 %s24, %s25
      %p38 = scmp.lt.s32.totalorder %s37, 1
      %s39 = scalar_select %p38, %s37, 1
      %s40 = sadd.s32 %s36, %s32
      %p41 = scmp.lt.s32.totalorder %s40, 1
      %s42 = scalar_select %p41, %s40, 1
      %s43 = ssub.s32 %s39, %s42
      %p44 = scmp.eq.s32.totalorder %s43, 0
      %s46 = sadd.s32 %s45, 1
      %s47 = scalar_select %p44, %s45, %s46
      %p50 = pneg %p44
      %p51 = scmp.eq.s32.totalorder %s17, 1
      %p52 = por %p50, %p51
      %p53 = scmp.ne.s32.totalorder %s45, %s48
      %p54 = scmp.eq.s32.totalorder %s17, 0
      %p55 = por %p53, %p54
      %p56 = scmp.ne.s32.totalorder %s45, %s48
      %p57 = scmp.eq.s32.totalorder %s22, 1
      %p58 = por %p56, %p57
      %p59 = scmp.ne.s32.totalorder %s48, %s49
      %p60 = scmp.eq.s32.totalorder %s22, 0
      %p61 = por %p59, %p60
      %p62 = scmp.ne.s32.totalorder %s48, %s49
      %p63 = scmp.eq.s32.totalorder %s23, 1
      %p64 = por %p62, %p63
      %p66 = scmp.ne.s32.totalorder %s49, %s65
      %p67 = scmp.eq.s32.totalorder %s23, 0
      %p68 = por %p66, %p67
      %s69 = sadd.s32 %s24, %s25
      %p70 = scmp.lt.s32.totalorder %s69, 1
      %s71 = scalar_select %p70, %s69, 1
      %s72 = sadd.s32 %s36, %s32
      %p73 = scmp.lt.s32.totalorder %s72, 1
      %s74 = scalar_select %p73, %s72, 1
      %s75 = ssub.s32 %s71, %s74
      %p76 = scmp.eq.s32.totalorder %s75, 0
      %s78 = sadd.s32 %s77, 1
      %s79 = scalar_select %p76, %s77, %s78
      %p82 = pneg %p76
      %p83 = scmp.eq.s32.totalorder %s17, 1
      %p84 = por %p82, %p83
      %p85 = scmp.ne.s32.totalorder %s77, %s80
      %p86 = scmp.eq.s32.totalorder %s17, 0
      %p87 = por %p85, %p86
      %p88 = scmp.ne.s32.totalorder %s77, %s80
      %p89 = scmp.eq.s32.totalorder %s22, 1
      %p90 = por %p88, %p89
      %p91 = scmp.ne.s32.totalorder %s80, %s81
      %p92 = scmp.eq.s32.totalorder %s22, 0
      %p93 = por %p91, %p92
      %p94 = scmp.ne.s32.totalorder %s80, %s81
      %p95 = scmp.eq.s32.totalorder %s23, 1
      %p96 = por %p94, %p95
      %p98 = scmp.ne.s32.totalorder %s81, %s97
      %p99 = scmp.eq.s32.totalorder %s23, 0
      %p100 = por %p98, %p99
      %s101 = ssub.s32 %s24, %s36
      %p102 = scmp.eq.s32.totalorder %s101, 0
      %s104 = sadd.s32 %s103, 1
      %s105 = scalar_select %p102, %s103, %s104
      %p108 = pneg %p102
      %p109 = scmp.eq.s32.totalorder %s17, 1
      %p110 = por %p108, %p109
      %p111 = scmp.ne.s32.totalorder %s103, %s106
      %p112 = scmp.eq.s32.totalorder %s17, 0
      %p113 = por %p111, %p112
      %p114 = scmp.ne.s32.totalorder %s103, %s106
      %p115 = scmp.eq.s32.totalorder %s22, 1
      %p116 = por %p114, %p115
      %p117 = scmp.ne.s32.totalorder %s106, %s107
      %p118 = scmp.eq.s32.totalorder %s22, 0
      %p119 = por %p117, %p118
      %p120 = scmp.ne.s32.totalorder %s106, %s107
      %p121 = scmp.eq.s32.totalorder %s23, 1
      %p122 = por %p120, %p121
      %p124 = scmp.ne.s32.totalorder %s107, %s123
      %p125 = scmp.eq.s32.totalorder %s23, 0
      %p126 = por %p124, %p125
      %p127 = scmp.le.s32.totalorder 1, %s17
      %p128 = scmp.lt.s32.totalorder %s17, 3
      %p129 = pnand %p127, %p128
      %p130 = pneg %p129
      // Predicated region
      $region9: #{tpu_custom_call.1} parent=5 // pred_check
        _
      $region10: #{tpu_custom_call.1} parent=5 // pred_check_branch
        %132 = sbr.rel (%p129) target = $region12
      $region11: #{tpu_custom_call.1} parent=5 // pred_region
        %s133 = ssub.s32 %s17, 1
      $region12: #{tpu_custom_call.1} parent=5 // pred_fallthru
        _
      %p134 = scmp.lt.s32.totalorder %s17, 2
      // Predicated region
      $region13: #{tpu_custom_call.1} parent=5 // pred_check
        %p135 = pneg %p134
      $region14: #{tpu_custom_call.1} parent=5 // pred_check_branch
        %137 = sbr.rel (%p135) target = $region16
      $region15: #{tpu_custom_call.1} parent=5 // pred_region
        // Predicated region
        $region17: #{tpu_custom_call.1} parent=15 // pred_check
          %p138 = pneg %p55
        $region18: #{tpu_custom_call.1} parent=15 // pred_check_branch
          %140 = sbr.rel (%p138) target = $region20
        $region19: #{tpu_custom_call.1} parent=15 // pred_region
          %s141 = sand.u32 %s45, 1
          %s142 = scalar_lea.sflag [#allocation3], %s141
          %s143 = sand.u32 %s45, 1
          %s144 = smul.addr %s143, 8
          %s145 = scalar_lea.vmem [#allocation2], %s144
          %s146 = sadd.s32 %s24, %s25
          %p147 = scmp.lt.s32.totalorder %s146, 1
          %s148 = scalar_select %p147, %s146, 1
          %s150 = ssub.s32 128, 128
          %151 = vsyncadd %s142, %s150
          %s152 = smul.addr %s148, 128
          %s153 = scalar_lea.hbm %s0, %s152
          %s155 = sshll.u32 %s145, 4
          %s156 = int_to_ptr.vmem [resolvable:$true] %s155
          %158 = dma.hbm_to_vmem [thread:$0]  %s153, 128, %s156, %s142
        $region20: #{tpu_custom_call.1} parent=15 // pred_fallthru
          _
        // Predicated region
        $region21: #{tpu_custom_call.1} parent=15 // pred_check
          %p159 = pneg %p87
        $region22: #{tpu_custom_call.1} parent=15 // pred_check_branch
          %161 = sbr.rel (%p159) target = $region24
        $region23: #{tpu_custom_call.1} parent=15 // pred_region
          %s162 = sand.u32 %s77, 1
          %s163 = scalar_lea.sflag [#allocation6], %s162
          %s164 = sand.u32 %s77, 1
          %s165 = smul.addr %s164, 8
          %s166 = scalar_lea.vmem [#allocation5], %s165
          %s167 = sadd.s32 %s24, %s25
          %p168 = scmp.lt.s32.totalorder %s167, 1
          %s169 = scalar_select %p168, %s167, 1
          %s171 = ssub.s32 128, 128
          %172 = vsyncadd %s163, %s171
          %s173 = smul.addr %s169, 128
          %s174 = scalar_lea.hbm %s1, %s173
          %s176 = sshll.u32 %s166, 4
          %s177 = int_to_ptr.vmem [resolvable:$true] %s176
          %179 = dma.hbm_to_vmem [thread:$0]  %s174, 128, %s177, %s163
        $region24: #{tpu_custom_call.1} parent=15 // pred_fallthru
          _
      $region16: #{tpu_custom_call.1} parent=5 // pred_fallthru
        _
      %p180 = scmp.le.s32.totalorder 1, %s17
      %p181 = scmp.lt.s32.totalorder %s17, 3
      %p182 = pnand %p180, %p181
      %p183 = pneg %p182
      // Predicated region
      $region25: #{tpu_custom_call.1} parent=5 // pred_check
        _
      $region26: #{tpu_custom_call.1} parent=5 // pred_check_branch
        %185 = sbr.rel (%p182) target = $region28
      $region27: #{tpu_custom_call.1} parent=5 // pred_region
        %s186 = ssub.s32 %s17, 1
        %s187 = sand.u32 %s48, 1
        %s188 = scalar_lea.sflag [#allocation3], %s187
        %s189 = sand.u32 %s48, 1
        %s190 = smul.addr %s189, 8
        %s191 = scalar_lea.vmem [#allocation2], %s190
        // Predicated region
        $region29: #{tpu_custom_call.1} parent=27 // pred_check
          %p192 = pneg %p61
        $region30: #{tpu_custom_call.1} parent=27 // pred_check_branch
          %194 = sbr.rel (%p192) target = $region32
        $region31: #{tpu_custom_call.1} parent=27 // pred_region
          %195 = dma.done %s188, 128
        $region32: #{tpu_custom_call.1} parent=27 // pred_fallthru
          _
        %s196 = sand.u32 %s80, 1
        %s197 = scalar_lea.sflag [#allocation6], %s196
        %s198 = sand.u32 %s80, 1
        %s199 = smul.addr %s198, 8
        %s200 = scalar_lea.vmem [#allocation5], %s199
        // Predicated region
        $region33: #{tpu_custom_call.1} parent=27 // pred_check
          %p201 = pneg %p93
        $region34: #{tpu_custom_call.1} parent=27 // pred_check_branch
          %203 = sbr.rel (%p201) target = $region36
        $region35: #{tpu_custom_call.1} parent=27 // pred_region
          %204 = dma.done %s197, 128
        $region36: #{tpu_custom_call.1} parent=27 // pred_fallthru
          _
        %s205 = sand.u32 %s48, 1
        %s206 = scalar_lea.sflag [#allocation3], %s205
        %s207 = sand.u32 %s48, 1
        %s208 = smul.addr %s207, 8
        %s209 = scalar_lea.vmem [#allocation2], %s208
        %p210 = pneg %p61
        %p211 = pneg %p58
        %s212 = sand.u32 %s80, 1
        %s213 = scalar_lea.sflag [#allocation6], %s212
        %s214 = sand.u32 %s80, 1
        %s215 = smul.addr %s214, 8
        %s216 = scalar_lea.vmem [#allocation5], %s215
        %p217 = pneg %p93
        %p218 = pneg %p90
        %p219 = pneg %p119
        %p220 = pneg %p116
        %s221 = sand.u32 %s106, 1
        %s222 = scalar_lea.sflag [#allocation4], %s221
        %s223 = sand.u32 %s106, 1
        %s224 = smul.addr %s223, 8
        %s225 = scalar_lea.vmem [#allocation7], %s224
        %s226 = sadd.s32 %s26, %s27
        %p227 = scmp.lt.s32.totalorder %s226, 1
        %s228 = scalar_select %p227, %s226, 1
        %s229 = sadd.s32 %s26, %s27
        %p230 = scmp.lt.s32.totalorder %s229, 1
        %s231 = scalar_select %p230, %s229, 1
        %s232 = sadd.s32 %s26, %s27
        %v233 = vld [vmem:[%s191] sm:$0xff]
        %v234 = vld [vmem:[%s200] sm:$0xff]
        %v235 = vand.u32 2147483647, %v233
        %v236 = vsub.f32 0.0, %v235
        %v237 = vmul.f32 %v236, 1.442695
        %v238 = vpow.pop %v237
        %v239 = vmax.f32 %v233, 0.0
        %v240 = vmul.f32 %v233, %v234
        %v241 = vsub.f32 %v239, %v240
        %v242 = vadd.f32 %v238, 1.0
        %v243 = vlog2.pop %v242
        %v244 = vmul.f32 %v243, 0.6931472
        %v245 = vmul.f32 -0.5, %v238
        %v246 = vadd.f32 %v245, 1.0
        %v247 = vmul.f32 %v246, %v238
        %v248 = vand.u32 2147483647, %v238
        %vm249 = vcmp.lt.f32.partialorder %v248, 0.0004427343
        %v250 = vsel %vm249, %v247, %v244
        %v251 = vadd.f32 %v241, %v250
        %v252 = vadd.f32 %v238, 1.0
        %v253 = vrcp.pop %v252
        %vm254 = vcmp.ge.f32.partialorder %v233, 0.0
        %v255 = vsub.f32 1.0, %v253
        %v256 = vsel %vm254, %v253, %v255
        %v257 = vsub.f32 %v256, %v234
        %v258 = vsub.f32 %v257, 1.0
        %v259 = vmul.f32 %v258, 19.96008
        %v260 = vmul.f32 %v259, 1.442695
        %v261 = vpow.pop %v260
        %v262 = vsub.f32 1.0, %v261
        %v263 = vmul.f32 %v251, %v262
        %p264 = scmp.eq.s32.totalorder %s27, 0
        // Predicated region
        $region37: #{tpu_custom_call.1} parent=27 // pred_check
          %p265 = pneg %p264
        $region38: #{tpu_custom_call.1} parent=27 // pred_check_branch
          %267 = sbr.rel (%p265) target = $region40
        $region39: #{tpu_custom_call.1} parent=27 // pred_region
          %268 = vst [vmem:[%s225] sm:$0xff] 0.0
        $region40: #{tpu_custom_call.1} parent=27 // pred_fallthru
          _
        %p269 = scmp.lt.s32.totalorder %s232, 2
        // Predicated region
        $region41: #{tpu_custom_call.1} parent=27 // pred_check
          %p270 = pneg %p269
        $region42: #{tpu_custom_call.1} parent=27 // pred_check_branch
          %272 = sbr.rel (%p270) target = $region44
        $region43: #{tpu_custom_call.1} parent=27 // pred_region
          %v273 = vld [vmem:[%s225] sm:$0xff]
          %v274 = vadd.f32 %v263, 0.0
          %v275 = vadd.f32 %v273, %v274
          %276 = vst [vmem:[%s225] sm:$0xff] %v275
        $region44: #{tpu_custom_call.1} parent=27 // pred_fallthru
          _
        %p277 = scmp.ge.s32.totalorder %s232, 2
        // Predicated region
        $region45: #{tpu_custom_call.1} parent=27 // pred_check
          %p278 = pneg %p277
        $region46: #{tpu_custom_call.1} parent=27 // pred_check_branch
          %280 = sbr.rel (%p278) target = $region48
        $region47: #{tpu_custom_call.1} parent=27 // pred_region
          %v281 = vlaneseq
          %v282 = vshrl.u32 %v281, 7
          %s283 = smul.u32 %s232, 8
          %v284 = vstv %s283
          %v285 = vadd.s32 %v282, %v284
          %v286 = vlaneseq
          %v287 = vand.u32 %v286, 127
          %v288 = vmul.u32 %v285, 128
          %v289 = vadd.s32 %v288, %v287
          %v290 = vld [vmem:[%s225] sm:$0xff]
          %vm291 = vcmp.lt.s32.totalorder %v289, 2048
          %v292 = vsel %vm291, %v263, 0.0
          %v293 = vadd.f32 %v292, 0.0
          %v294 = vadd.f32 %v290, %v293
          %295 = vst [vmem:[%s225] sm:$0xff] %v294
        $region48: #{tpu_custom_call.1} parent=27 // pred_fallthru
          _
        %s296 = sand.u32 %s106, 1
        %s297 = scalar_lea.sflag [#allocation4], %s296
        %s298 = sand.u32 %s106, 1
        %s299 = smul.addr %s298, 8
        %s300 = scalar_lea.vmem [#allocation7], %s299
        // Predicated region
        $region49: #{tpu_custom_call.1} parent=27 // pred_check
          %p301 = pneg %p116
        $region50: #{tpu_custom_call.1} parent=27 // pred_check_branch
          %303 = sbr.rel (%p301) target = $region52
        $region51: #{tpu_custom_call.1} parent=27 // pred_region
          %s305 = ssub.s32 128, 128
          %306 = vsyncadd %s297, %s305
          %s307 = smul.addr %s26, 128
          %s308 = scalar_lea.hbm %s2, %s307
          %s310 = sshll.u32 %s300, 4
          %s311 = int_to_ptr.vmem [resolvable:$true] %s310
          %313 = dma.vmem_to_hbm [thread:$0]  %s311, 128, %s308, %s297
        $region52: #{tpu_custom_call.1} parent=27 // pred_fallthru
          _
      $region28: #{tpu_custom_call.1} parent=5 // pred_fallthru
        _
      %p314 = scmp.le.s32.totalorder 2, %s17
      // Predicated region
      $region53: #{tpu_custom_call.1} parent=5 // pred_check
        %p315 = pneg %p314
      $region54: #{tpu_custom_call.1} parent=5 // pred_check_branch
        %317 = sbr.rel (%p315) target = $region56
      $region55: #{tpu_custom_call.1} parent=5 // pred_region
        %s318 = ssub.s32 %s17, 2
        // Predicated region
        $region57: #{tpu_custom_call.1} parent=55 // pred_check
          %p319 = pneg %p122
        $region58: #{tpu_custom_call.1} parent=55 // pred_check_branch
          %321 = sbr.rel (%p319) target = $region60
        $region59: #{tpu_custom_call.1} parent=55 // pred_region
          %s322 = sand.u32 %s107, 1
          %s323 = scalar_lea.sflag [#allocation4], %s322
          %s324 = sand.u32 %s107, 1
          %s325 = smul.addr %s324, 8
          %s326 = scalar_lea.vmem [#allocation7], %s325
          %327 = dma.done %s323, 128
        $region60: #{tpu_custom_call.1} parent=55 // pred_fallthru
          _
      $region56: #{tpu_custom_call.1} parent=5 // pred_fallthru
        _
    $region6: #{tpu_custom_call.1} parent=1 // loop_footer
      %s21 = sadd.s32 1, %s17
    $region7: #{tpu_custom_call.1} parent=1 // loop_footer_branch
      %16 = sbr.rel target = $region3
    $region8: #{tpu_custom_call.1} parent=1 // loop_exit
      _
    %328 = vsyncpa [#allocation3], 1
    %s329 = scalar_lea.sflag [#allocation3], 1
    %330 = vsyncpa %s329, 1
    %331 = vsyncpa [#allocation6], 1
    %s332 = scalar_lea.sflag [#allocation6], 1
    %333 = vsyncpa %s332, 1
    %334 = vsyncpa [#allocation4], 1
    %s335 = scalar_lea.sflag [#allocation4], 1
    %336 = vsyncpa %s335, 1

</llo_original>
